<compile_context>
chip_gen: v7x
topology: tpu7x:2x2x1
jax: 0.10.0
libtpu: 0.0.40
codegen_flags: <defaults>
</compile_context>

<pallas_src>
import jax
import jax.numpy as jnp
from jax import lax
from jax.experimental import pallas as pl
from jax.experimental.pallas import tpu as pltpu


# ---------------------------------------------------------------------------
# Small-batch path: gridless, all operands resident in VMEM.
# ---------------------------------------------------------------------------
def _linear_softmax_kernel_small(x_ref, wt_ref, b_ref, o_ref):
    # x_ref: (B, D_in), wt_ref: (D_in, D_out), b_ref: (1, D_out), o_ref: (B, D_out)
    x = x_ref[...]
    wt = wt_ref[...]
    b = b_ref[...]

    # Linear: x @ W^T + b (W^T prepared in the wrapper -> no in-kernel relayout).
    logits = jnp.dot(x, wt, preferred_element_type=jnp.float32) + b

    # Numerically stable softmax over the feature (last) dim. Exact division:
    # approx reciprocal previously pushed error past the reference tolerance.
    m = jnp.max(logits, axis=-1, keepdims=True)
    e = jnp.exp(logits - m)
    denom = jnp.sum(e, axis=-1, keepdims=True)
    o_ref[...] = (e / denom).astype(o_ref.dtype)


def _forward_small(x, weight, bias):
    B, _ = x.shape
    d_out = weight.shape[0]
    wt = weight.T                      # (D_in, D_out) — tiny, one-time layout plumbing
    b2 = bias.reshape(1, d_out)
    return pl.pallas_call(
        _linear_softmax_kernel_small,
        out_shape=jax.ShapeDtypeStruct((B, d_out), jnp.float32),
        in_specs=[
            pl.BlockSpec(memory_space=pltpu.MemorySpace.VMEM),
            pl.BlockSpec(memory_space=pltpu.MemorySpace.VMEM),
            pl.BlockSpec(memory_space=pltpu.MemorySpace.VMEM),
        ],
        out_specs=pl.BlockSpec(memory_space=pltpu.MemorySpace.VMEM),
    )(x, wt, b2)


# ---------------------------------------------------------------------------
# Large-batch path: x read once in natural layout, lane-dense (D_out, TB) compute.
# ---------------------------------------------------------------------------
def _linear_softmax_kernel_tiled(x_ref, w_ref, b_ref, ot_ref):
    # x_ref: (TB, D_in) natural layout, w_ref: (D_out, D_in),
    # b_ref: (D_out, 1), ot_ref: (D_out, TB) lane-dense.
    x = x_ref[...]
    w = w_ref[...]
    b = b_ref[...]

    # logits = W @ x^T without any wrapper-side transpose of x:
    # contract D_in (dim 1 of both operands) -> (D_out, TB), batch on lanes.
    logits = lax.dot_general(
        w, x, (((1,), (1,)), ((), ())), preferred_element_type=jnp.float32
    ) + b

    # Per-column (per-example) softmax over the feature axis (axis 0).
    # Columns are fully independent, so garbage columns from a ragged final
    # block can never leak into valid columns (and their stores are clipped).
    m = jnp.max(logits, axis=0, keepdims=True)
    e = jnp.exp(logits - m)
    denom = jnp.sum(e, axis=0, keepdims=True)
    ot_ref[...] = (e / denom).astype(ot_ref.dtype)


def _forward_tiled(x, weight, bias, *, batch_tile=32768):
    B, d_in = x.shape
    d_out = weight.shape[0]
    n_tiles = pl.cdiv(B, batch_tile)
    b2 = bias.reshape(d_out, 1)

    out_t = pl.pallas_call(
        _linear_softmax_kernel_tiled,
        out_shape=jax.ShapeDtypeStruct((d_out, B), jnp.float32),
        grid_spec=pltpu.PrefetchScalarGridSpec(
            num_scalar_prefetch=0,
            grid=(n_tiles,),
            in_specs=[
                # x in its natural layout: one contiguous DMA per tile.
                pl.BlockSpec((batch_tile, d_in), lambda i: (i, 0)),
                # Weight and bias stay VMEM-resident across all tiles.
                pl.BlockSpec((d_out, d_in), lambda i: (0, 0)),
                pl.BlockSpec((d_out, 1), lambda i: (0, 0)),
            ],
            out_specs=pl.BlockSpec((d_out, batch_tile), lambda i: (0, i)),
        ),
        # Independent batch tiles: lets v7x shard across its 2 TensorCores.
        compiler_params=pltpu.CompilerParams(
            dimension_semantics=("parallel",),
        ),
    )(x, weight, b2)

    # Tiny (3, B) -> (B, 3) relayout in XLA; kernel stores stay lane-dense.
    return out_t.T


def linear_classifier_forward(x, weight, bias, *, batch_tile=32768):
    """Forward of LinearClassifier: softmax(x @ W.T + b) over the feature dim.

    x: (B, input_dim) f32; weight: (output_dim, input_dim); bias: (output_dim,).
    Small batches use the gridless single-block kernel; large batches use the
    lane-dense, batch-tiled, pipelined kernel.
    """
    B = x.shape[0]
    if B > 1024:                       # fixed cutoff, decoupled from batch_tile
        return _forward_tiled(x, weight, bias, batch_tile=batch_tile)
    return _forward_small(x, weight, bias)


if __name__ == "__main__":
    input_dim, output_dim = 10, 3

    key = jax.random.PRNGKey(0)
    kx, kw, kb, kx2 = jax.random.split(key, 4)

    # Deterministic parameter init (mimicking nn.Linear's uniform(-1/sqrt(fan_in), .)).
    bound = 1.0 / (input_dim ** 0.5)
    weight = jax.random.uniform(kw, (output_dim, input_dim), jnp.float32, -bound, bound)
    bias = jax.random.uniform(kb, (output_dim,), jnp.float32, -bound, bound)

    # Small-batch (gridless) path.
    x = jax.random.normal(kx, (8, input_dim), jnp.float32)
    out = jax.block_until_ready(linear_classifier_forward(x, weight, bias))
    ref = jax.nn.softmax(x @ weight.T + bias, axis=-1)
    assert out.shape == (8, output_dim)
    assert jnp.allclose(out, ref, atol=1e-5, rtol=1e-5), "small-path mismatch vs reference"

    # Batch-tiled (lane-dense) path; non-multiple batch exercises the ragged final block.
    x_big = jax.random.normal(kx2, (1300, input_dim), jnp.float32)
    out_big = jax.block_until_ready(
        linear_classifier_forward(x_big, weight, bias, batch_tile=512)
    )
    ref_big = jax.nn.softmax(x_big @ weight.T + bias, axis=-1)
    assert out_big.shape == (1300, output_dim)
    assert jnp.allclose(out_big, ref_big, atol=1e-5, rtol=1e-5), "tiled-path mismatch vs reference"

    print("KERNEL_OK")
</pallas_src>

<mosaic_0001>
module attributes {stable_mosaic.version = 11 : i64} {
  func.func @_linear_softmax_kernel_small(%arg0: memref<8x10xf32, #tpu.memory_space<vmem>>, %arg1: memref<10x3xf32, #tpu.memory_space<vmem>>, %arg2: memref<1x3xf32, #tpu.memory_space<vmem>>, %arg3: memref<8x3xf32, #tpu.memory_space<vmem>>) attributes {dimension_semantics = [], scalar_prefetch = 0 : i64, scratch_operands = 0 : i64, tpu.core_type = #tpu.core_type<tc>} {
    %c0 = arith.constant 0 : index
    %c0_0 = arith.constant 0 : index
    %0 = vector.load %arg0[%c0, %c0_0] : memref<8x10xf32, #tpu.memory_space<vmem>>, vector<8x10xf32>
    %c0_1 = arith.constant 0 : index
    %c0_2 = arith.constant 0 : index
    %1 = vector.load %arg1[%c0_1, %c0_2] : memref<10x3xf32, #tpu.memory_space<vmem>>, vector<10x3xf32>
    %c0_3 = arith.constant 0 : index
    %c0_4 = arith.constant 0 : index
    %2 = vector.load %arg2[%c0_3, %c0_4] : memref<1x3xf32, #tpu.memory_space<vmem>>, vector<1x3xf32>
    %cst = arith.constant dense<0.000000e+00> : vector<8x3xf32>
    %3 = tpu.matmul %0, %1, %cst {dimension_numbers = #tpu.dot_dimension_numbers<[1], [0], [0], [1], [0, 0, 1, 1], [], []>} : vector<8x10xf32>, vector<10x3xf32>, vector<8x3xf32> -> vector<8x3xf32>
    %4 = vector.broadcast %2 : vector<1x3xf32> to vector<8x3xf32>
    %5 = arith.addf %3, %4 : vector<8x3xf32>
    %cst_5 = arith.constant dense<0xFF800000> : vector<8xf32>
    %6 = vector.multi_reduction <maximumf>, %5, %cst_5 [1] : vector<8x3xf32> to vector<8xf32>
    %7 = vector.shape_cast %6 : vector<8xf32> to vector<8x1xf32>
    %8 = vector.broadcast %7 : vector<8x1xf32> to vector<8x3xf32>
    %9 = arith.subf %5, %8 : vector<8x3xf32>
    %10 = math.exp %9 : vector<8x3xf32>
    %cst_6 = arith.constant dense<0.000000e+00> : vector<8xf32>
    %11 = vector.multi_reduction <add>, %10, %cst_6 [1] : vector<8x3xf32> to vector<8xf32>
    %12 = vector.shape_cast %11 : vector<8xf32> to vector<8x1xf32>
    %13 = vector.broadcast %12 : vector<8x1xf32> to vector<8x3xf32>
    %14 = arith.divf %10, %13 : vector<8x3xf32>
    %c0_7 = arith.constant 0 : index
    %c0_8 = arith.constant 0 : index
    %15 = vector.load %arg3[%c0_7, %c0_8] : memref<8x3xf32, #tpu.memory_space<vmem>>, vector<8x3xf32>
    tpu.vector_store %arg3[%c0_7, %c0_8], %14 {strides = array<i32>} : memref<8x3xf32, #tpu.memory_space<vmem>>, vector<8x3xf32>,
    return
  }
}

</mosaic_0001>

<llo_original>
// kernel: tpu_custom_call.1
$region0: #{tpu_custom_call.1}
  #allocation0 [shape = 'u32[]', space=smem, size = 0x4, offset = 0x4, fixed_abs, tag = 'smem constant byte address 0x4 - core index']
  #allocation1 [shape = 'u32[144,128]{1,0:T(1,128)}', space=vmem, size = 0x12000, scoped, tag = 'internal scratch']
  %s0 = inlined_call_operand.vmem [shape: f32[8,10], index: 0, kind: input, shape index: {}]
  %s1 = inlined_call_operand.vmem [shape: f32[10,3], index: 1, kind: input, shape index: {}]
  %s2 = inlined_call_operand.vmem [shape: f32[1,3], index: 2, kind: input, shape index: {}]
  %s3 = inlined_call_operand.vmem [shape: f32[8,3], index: 3, kind: output, shape index: {}]
  %s4 = sld [smem:[#allocation0]]
  $region22: #{tpu_custom_call.1} parent=0
    _
  %s6 = ssub.s32 1, %s4
  %s7 = scalar_select 0, %s6, %s4
  // Predicated region
  $region2: #{tpu_custom_call.1} parent=0 // pred_check
    _
  $region3: #{tpu_custom_call.1} parent=0 // pred_check_branch
    %9 = sbr.rel (0) target = $region5
  $region4: #{tpu_custom_call.1} parent=0 // pred_region
    _
  $region5: #{tpu_custom_call.1} parent=0 // pred_fallthru
    _
  // Predicated region
  $region6: #{tpu_custom_call.1} parent=0 // pred_check
    _
  $region7: #{tpu_custom_call.1} parent=0 // pred_check_branch
    %11 = sbr.rel (0) target = $region9
  $region8: #{tpu_custom_call.1} parent=0 // pred_region
    _
  $region9: #{tpu_custom_call.1} parent=0 // pred_fallthru
    _
  // Predicated region
  $region10: #{tpu_custom_call.1} parent=0 // pred_check
    _
  $region11: #{tpu_custom_call.1} parent=0 // pred_check_branch
    %13 = sbr.rel (0) target = $region13
  $region12: #{tpu_custom_call.1} parent=0 // pred_region
    _
  $region13: #{tpu_custom_call.1} parent=0 // pred_fallthru
    _
  %v14 = vld [vmem:[%s0] sm:$0xff]
  %v15 = vld [vmem:[%s1] sm:$0xff]
  %v16 = vld [vmem:[%s1 + $0x8] sm:$0x3]
  %v17 = vld [vmem:[%s2] sm:$0x1]
  %v19 = vlaneseq
  %v20 = vshrl.u32 %v19, 7
  %v21 = vsub.s32 0, %v20
  %v22 = vrot.slane %v17, %v21
  %vm24 = vcmask 80896
  %v26 = vsel %vm24, %v14, 0
  %vm28 = vcmask 1041408
  %v30 = vsel %vm28, %v16, 0
  %32 = vmatprep.subr.mxu0 0.0
  %33 = vmatpush1.msra.mxu0 %v15
  %34 = vmatprep.subr.mxu0 0.0
  %35 = vmatpush1.msra.mxu0 %v30
  %36 = vmatprep.subr.mxu0 0.0
  %37 = vmatpush1.msra.mxu0 0.0
  %38 = vmatprep.subr.mxu0 0.0
  %39 = vmatpush1.msra.mxu0 0.0
  %40 = vmatprep.subr.mxu0 0.0
  %41 = vmatpush1.msra.mxu0 0.0
  %42 = vmatprep.subr.mxu0 0.0
  %43 = vmatpush1.msra.mxu0 0.0
  %44 = vmatprep.subr.mxu0 0.0
  %45 = vmatpush1.msra.mxu0 0.0
  %46 = vmatprep.subr.mxu0 0.0
  %47 = vmatpush1.msra.mxu0 0.0
  %48 = vmatprep.subr.mxu0 0.0
  %49 = vmatpush1.msra.mxu0 0.0
  %50 = vmatprep.subr.mxu0 0.0
  %51 = vmatpush1.msra.mxu0 0.0
  %52 = vmatprep.subr.mxu0 0.0
  %53 = vmatpush1.msra.mxu0 0.0
  %54 = vmatprep.subr.mxu0 0.0
  %55 = vmatpush1.msra.mxu0 0.0
  %56 = vmatprep.subr.mxu0 0.0
  %57 = vmatpush1.msra.mxu0 0.0
  %58 = vmatprep.subr.mxu0 0.0
  %59 = vmatpush1.msra.mxu0 0.0
  %60 = vmatprep.subr.mxu0 0.0
  %61 = vmatpush1.msra.mxu0 0.0
  %62 = vmatprep.subr.mxu0 0.0
  %63 = vmatpush1.msra.mxu0 0.0
  %64 = vmatprep.subr.mxu0 0.0
  %65 = vmatpush1.msra.mxu0 0.0
  %66 = vmatprep.subr.mxu0 0.0
  %67 = vmatpush1.msra.mxu0 0.0
  %68 = vmatprep.subr.mxu0 0.0
  %69 = vmatpush1.msra.mxu0 0.0
  %70 = vmatprep.subr.mxu0 0.0
  %71 = vmatpush1.msra.mxu0 0.0
  %72 = vmatprep.subr.mxu0 0.0
  %73 = vmatpush1.msra.mxu0 0.0
  %74 = vmatprep.subr.mxu0 0.0
  %75 = vmatpush1.msra.mxu0 0.0
  %76 = vmatprep.subr.mxu0 0.0
  %77 = vmatpush1.msra.mxu0 0.0
  %78 = vmatprep.subr.mxu0 0.0
  %79 = vmatpush1.msra.mxu0 0.0
  %80 = vmatprep.subr.mxu0 0.0
  %81 = vmatpush1.msra.mxu0 0.0
  %82 = vmatprep.subr.mxu0 0.0
  %83 = vmatpush1.msra.mxu0 0.0
  %84 = vmatprep.subr.mxu0 0.0
  %85 = vmatpush1.msra.mxu0 0.0
  %86 = vmatprep.subr.mxu0 0.0
  %87 = vmatpush1.msra.mxu0 0.0
  %88 = vmatprep.subr.mxu0 0.0
  %89 = vmatpush1.msra.mxu0 0.0
  %90 = vmatprep.subr.mxu0 0.0
  %91 = vmatpush1.msra.mxu0 0.0
  %92 = vmatprep.subr.mxu0 0.0
  %93 = vmatpush1.msra.mxu0 0.0
  %94 = vmatprep.subr.mxu0 0.0
  %95 = vmatpush1.msra.mxu0 0.0
  %96 = vmatprep.mubr.f32.mxu0 0.0
  %97 = vmatmul.mubr.f32.gmra.mrb[0].mxu0 %v26
  %v98 = vpop.f32.mrb[0].mxu0
  %v99 = vadd.f32 %v22, %v98
  %v100 = vpop.f32.mrb[0].mxu0
  %101 = vdwg.mxu0
  %vm102 = vcmask 23552
  %v103 = vsel %vm102, %v99, -inf
  %104 = vmax.xlane.f32.xlu0 %v103
  %v105 = vpop.xlane.xlu0 %104
  %v106 = vsub.f32 %v99, %v105
  %v107 = vmul.f32 %v106, 1.442695
  %v108 = vpow.pop %v107
  %v109 = vsel %vm102, %v108, 0.0
  %110 = vadd.xlane.f32.xlu0 %v109
  %v111 = vpop.xlane.xlu0 %110
  %v112 = vrcp.pop %v111
  %v113 = vmul.f32 %v108, %v112
  %114 = vst.msk [vmem:[%s3] sm:$0xff] %vm102, %v113
  // Predicated region
  $region14: #{tpu_custom_call.1} parent=0 // pred_check
    _
  $region15: #{tpu_custom_call.1} parent=0 // pred_check_branch
    %116 = sbr.rel (0) target = $region17
  $region16: #{tpu_custom_call.1} parent=0 // pred_region
    _
  $region17: #{tpu_custom_call.1} parent=0 // pred_fallthru
    _
  // Predicated region
  $region18: #{tpu_custom_call.1} parent=0 // pred_check
    _
  $region19: #{tpu_custom_call.1} parent=0 // pred_check_branch
    %118 = sbr.rel (0) target = $region21
  $region20: #{tpu_custom_call.1} parent=0 // pred_region
    _
  $region21: #{tpu_custom_call.1} parent=0 // pred_fallthru
    _

</llo_original>
